<compile_context>
chip_gen: v5e
topology: v5e:2x2
jax: 0.10.0
libtpu: 0.0.40
codegen_flags: <defaults>
</compile_context>

<pallas_src>
import jax
import jax.numpy as jnp
from jax.experimental import pallas as pl
from jax.experimental.pallas import tpu as pltpu

OBS_SPACE = 8        # LunarLander-v2 observation dim
ACTION_SPACE = 4     # LunarLander-v2 action dim
HIDDEN = 64
HEADS = ACTION_SPACE + 1   # fused actor (4 logits) + critic (1 value) columns
MAX_TB = 256               # batch tile: MXU height on v6e/v7x, multiple of 8


def actor_critic_kernel(s_ref, w1_ref, b1_ref, wh_ref, bh_ref, out_ref):
    # first_layer: Linear(OBS -> 64) + ReLU
    x = jnp.dot(s_ref[...], w1_ref[...],
                preferred_element_type=jnp.float32) + b1_ref[...]
    x = jnp.maximum(x, 0.0)

    # fused heads: Linear(64 -> ACTION_SPACE + 1) in a single MXU pass
    y = jnp.dot(x, wh_ref[...],
                preferred_element_type=jnp.float32) + bh_ref[...]

    # softmax only over the ACTION_SPACE logit columns (value column untouched,
    # so no padding/extra lanes can contaminate the reductions)
    logits = y[:, :ACTION_SPACE]
    m = jnp.max(logits, axis=-1, keepdims=True)
    e = jnp.exp(logits - m)
    pi = e * pl.reciprocal(jnp.sum(e, axis=-1, keepdims=True), approx=False)

    # single packed store: [pi | v]
    out_ref[...] = jnp.concatenate([pi, y[:, ACTION_SPACE:]], axis=-1)


def actor_critic_forward(state, params):
    """state: (B, OBS_SPACE) float32. Returns (pi_probs (B, A), value (B,))."""
    w1, b1, w2, b2, wv, bv = params
    B = state.shape[0]

    # Fuse the actor and value heads into one (HIDDEN, HEADS) weight/bias.
    # (Cheap host-side concat; in training code these would be stored fused.)
    w_heads = jnp.concatenate([w2, wv], axis=-1)   # (64, 5)
    b_heads = jnp.concatenate([b2, bv], axis=-1)   # (1, 5)

    # Batch tiling: whole batch for small B (block dim == full dim is legal),
    # otherwise 256-row tiles (multiple of 8, matches v6e/v7x MXU height).
    TB = B if B <= MAX_TB else MAX_TB
    grid = (pl.cdiv(B, TB),)

    vmem = pltpu.MemorySpace.VMEM
    tiled = lambda shp: pl.BlockSpec(shp, lambda i: (i, 0), memory_space=vmem)
    resident = lambda shp: pl.BlockSpec(shp, lambda i: (0, 0), memory_space=vmem)

    packed = pl.pallas_call(
        actor_critic_kernel,
        out_shape=jax.ShapeDtypeStruct((B, HEADS), jnp.float32),
        grid=grid,
        in_specs=[
            tiled((TB, OBS_SPACE)),                 # state: tiled over batch
            resident(w1.shape), resident(b1.shape),  # VMEM-resident weights
            resident(w_heads.shape), resident(b_heads.shape),
        ],
        out_specs=tiled((TB, HEADS)),               # single packed output
        compiler_params=pltpu.CompilerParams(
            dimension_semantics=("parallel",)),     # megacore-shardable (v7x)
    )(state, w1, b1, w_heads, b_heads)

    pi = packed[:, :ACTION_SPACE]
    v = packed[:, ACTION_SPACE]                     # torch.squeeze(v)
    return pi, v


def actor_critic_ref(state, params):
    """Pure-JAX reference of the PyTorch forward (for correctness check)."""
    w1, b1, w2, b2, wv, bv = params
    x = jnp.maximum(state @ w1 + b1, 0.0)
    pi = jax.nn.softmax(x @ w2 + b2, axis=-1)
    v = jnp.squeeze(x @ wv + bv, axis=-1)
    return pi, v


def init_params(key):
    """Deterministic init mimicking PyTorch Linear default (U(-k,k), k=1/sqrt(fan_in))."""
    ks = jax.random.split(key, 6)

    def linear(kw, kb, fan_in, fan_out):
        bound = 1.0 / jnp.sqrt(jnp.float32(fan_in))
        w = jax.random.uniform(kw, (fan_in, fan_out), jnp.float32, -bound, bound)
        b = jax.random.uniform(kb, (1, fan_out), jnp.float32, -bound, bound)
        return w, b

    w1, b1 = linear(ks[0], ks[1], OBS_SPACE, HIDDEN)
    w2, b2 = linear(ks[2], ks[3], HIDDEN, ACTION_SPACE)
    wv, bv = linear(ks[4], ks[5], HIDDEN, 1)
    return (w1, b1, w2, b2, wv, bv)


if __name__ == "__main__":
    key = jax.random.PRNGKey(0)
    kp, ks1, ks2 = jax.random.split(key, 3)

    params = init_params(kp)

    # Small inference-style batch (single grid step).
    B = 2
    state = jax.random.normal(ks1, (B, OBS_SPACE), dtype=jnp.float32)
    pi, v = actor_critic_forward(state, params)
    jax.block_until_ready((pi, v))

    pi_r, v_r = actor_critic_ref(state, params)
    assert pi.shape == (B, ACTION_SPACE)
    assert v.shape == (B,)
    assert bool(jnp.allclose(jnp.sum(pi, axis=-1), 1.0, atol=1e-5))
    assert bool(jnp.allclose(pi, pi_r, atol=1e-5))
    assert bool(jnp.allclose(v, v_r, atol=1e-5))

    # Larger rollout-style batch to exercise the tiled / pipelined path.
    B2 = 512
    state2 = jax.random.normal(ks2, (B2, OBS_SPACE), dtype=jnp.float32)
    pi2, v2 = actor_critic_forward(state2, params)
    jax.block_until_ready((pi2, v2))
    pi2_r, v2_r = actor_critic_ref(state2, params)
    assert bool(jnp.allclose(pi2, pi2_r, atol=1e-5))
    assert bool(jnp.allclose(v2, v2_r, atol=1e-5))

    print("KERNEL_OK")
</pallas_src>

<mosaic_0001>
module attributes {stable_mosaic.version = 11 : i64} {
  func.func @actor_critic_kernel(%arg0: i32, %arg1: memref<2x8xf32, #tpu.memory_space<vmem>>, %arg2: memref<8x64xf32, #tpu.memory_space<vmem>>, %arg3: memref<1x64xf32, #tpu.memory_space<vmem>>, %arg4: memref<64x5xf32, #tpu.memory_space<vmem>>, %arg5: memref<1x5xf32, #tpu.memory_space<vmem>>, %arg6: memref<2x5xf32, #tpu.memory_space<vmem>>) attributes {dimension_semantics = [#tpu.dimension_semantics<parallel>], iteration_bounds = array<i64: 1>, scalar_prefetch = 0 : i64, scratch_operands = 0 : i64, tpu.core_type = #tpu.core_type<tc>, window_params = [{transform_indices = @transform_0, window_bounds = array<i64: 2, 8>}, {pipeline_mode = #tpu.pipeline_mode<synchronous>, transform_indices = @transform_1, window_bounds = array<i64: 8, 64>}, {pipeline_mode = #tpu.pipeline_mode<synchronous>, transform_indices = @transform_2, window_bounds = array<i64: 1, 64>}, {pipeline_mode = #tpu.pipeline_mode<synchronous>, transform_indices = @transform_3, window_bounds = array<i64: 64, 5>}, {pipeline_mode = #tpu.pipeline_mode<synchronous>, transform_indices = @transform_4, window_bounds = array<i64: 1, 5>}, {transform_indices = @transform_5, window_bounds = array<i64: 2, 5>}]} {
    %c0 = arith.constant 0 : index
    %c0_0 = arith.constant 0 : index
    %0 = vector.load %arg1[%c0, %c0_0] : memref<2x8xf32, #tpu.memory_space<vmem>>, vector<2x8xf32>
    %c0_1 = arith.constant 0 : index
    %c0_2 = arith.constant 0 : index
    %1 = vector.load %arg2[%c0_1, %c0_2] : memref<8x64xf32, #tpu.memory_space<vmem>>, vector<8x64xf32>
    %cst = arith.constant dense<0.000000e+00> : vector<2x64xf32>
    %2 = tpu.matmul %0, %1, %cst {dimension_numbers = #tpu.dot_dimension_numbers<[1], [0], [0], [1], [0, 0, 1, 1], [], []>} : vector<2x8xf32>, vector<8x64xf32>, vector<2x64xf32> -> vector<2x64xf32>
    %c0_3 = arith.constant 0 : index
    %c0_4 = arith.constant 0 : index
    %3 = vector.load %arg3[%c0_3, %c0_4] : memref<1x64xf32, #tpu.memory_space<vmem>>, vector<1x64xf32>
    %4 = vector.broadcast %3 : vector<1x64xf32> to vector<2x64xf32>
    %5 = arith.addf %2, %4 : vector<2x64xf32>
    %cst_5 = arith.constant 0.000000e+00 : f32
    %6 = vector.broadcast %cst_5 : f32 to vector<2x64xf32>
    %7 = arith.maximumf %5, %6 : vector<2x64xf32>
    %c0_6 = arith.constant 0 : index
    %c0_7 = arith.constant 0 : index
    %8 = vector.load %arg4[%c0_6, %c0_7] : memref<64x5xf32, #tpu.memory_space<vmem>>, vector<64x5xf32>
    %cst_8 = arith.constant dense<0.000000e+00> : vector<2x5xf32>
    %9 = tpu.matmul %7, %8, %cst_8 {dimension_numbers = #tpu.dot_dimension_numbers<[1], [0], [0], [1], [0, 0, 1, 1], [], []>} : vector<2x64xf32>, vector<64x5xf32>, vector<2x5xf32> -> vector<2x5xf32>
    %c0_9 = arith.constant 0 : index
    %c0_10 = arith.constant 0 : index
    %10 = vector.load %arg5[%c0_9, %c0_10] : memref<1x5xf32, #tpu.memory_space<vmem>>, vector<1x5xf32>
    %11 = vector.broadcast %10 : vector<1x5xf32> to vector<2x5xf32>
    %12 = arith.addf %9, %11 : vector<2x5xf32>
    %13 = vector.extract_strided_slice %12 {offsets = [0, 0], sizes = [2, 4], strides = [1, 1]} : vector<2x5xf32> to vector<2x4xf32>
    %cst_11 = arith.constant dense<0xFF800000> : vector<2xf32>
    %14 = vector.multi_reduction <maximumf>, %13, %cst_11 [1] : vector<2x4xf32> to vector<2xf32>
    %15 = vector.shape_cast %14 : vector<2xf32> to vector<2x1xf32>
    %16 = vector.broadcast %15 : vector<2x1xf32> to vector<2x4xf32>
    %17 = arith.subf %13, %16 : vector<2x4xf32>
    %18 = math.exp %17 : vector<2x4xf32>
    %cst_12 = arith.constant dense<0.000000e+00> : vector<2xf32>
    %19 = vector.multi_reduction <add>, %18, %cst_12 [1] : vector<2x4xf32> to vector<2xf32>
    %20 = vector.shape_cast %19 : vector<2xf32> to vector<2x1xf32>
    %21 = tpu.reciprocal %20 : vector<2x1xf32> -> vector<2x1xf32>
    %22 = vector.broadcast %21 : vector<2x1xf32> to vector<2x4xf32>
    %23 = arith.mulf %18, %22 : vector<2x4xf32>
    %24 = vector.extract_strided_slice %12 {offsets = [0, 4], sizes = [2, 1], strides = [1, 1]} : vector<2x5xf32> to vector<2x1xf32>
    %25 = tpu.concatenate %23, %24 in 1 : vector<2x4xf32>, vector<2x1xf32> -> vector<2x5xf32>
    %c0_13 = arith.constant 0 : index
    %c0_14 = arith.constant 0 : index
    %26 = vector.load %arg6[%c0_13, %c0_14] : memref<2x5xf32, #tpu.memory_space<vmem>>, vector<2x5xf32>
    tpu.vector_store %arg6[%c0_13, %c0_14], %25 {strides = array<i32>} : memref<2x5xf32, #tpu.memory_space<vmem>>, vector<2x5xf32>,
    return
  }
  func.func @transform_0(%arg0: i32) -> (i32, i32) {
    %c0_i32 = arith.constant 0 : i32
    %c0_i32_0 = arith.constant 0 : i32
    return %arg0, %c0_i32 : i32, i32
  }
  func.func @transform_1(%arg0: i32) -> (i32, i32) {
    %c0_i32 = arith.constant 0 : i32
    %c0_i32_0 = arith.constant 0 : i32
    %c0_i32_1 = arith.constant 0 : i32
    return %c0_i32, %c0_i32_0 : i32, i32
  }
  func.func @transform_2(%arg0: i32) -> (i32, i32) {
    %c0_i32 = arith.constant 0 : i32
    %c0_i32_0 = arith.constant 0 : i32
    %c0_i32_1 = arith.constant 0 : i32
    return %c0_i32, %c0_i32_0 : i32, i32
  }
  func.func @transform_3(%arg0: i32) -> (i32, i32) {
    %c0_i32 = arith.constant 0 : i32
    %c0_i32_0 = arith.constant 0 : i32
    %c0_i32_1 = arith.constant 0 : i32
    return %c0_i32, %c0_i32_0 : i32, i32
  }
  func.func @transform_4(%arg0: i32) -> (i32, i32) {
    %c0_i32 = arith.constant 0 : i32
    %c0_i32_0 = arith.constant 0 : i32
    %c0_i32_1 = arith.constant 0 : i32
    return %c0_i32, %c0_i32_0 : i32, i32
  }
  func.func @transform_5(%arg0: i32) -> (i32, i32) {
    %c0_i32 = arith.constant 0 : i32
    %c0_i32_0 = arith.constant 0 : i32
    return %arg0, %c0_i32 : i32, i32
  }
}

</mosaic_0001>

<llo_original>
// kernel: tpu_custom_call.1
$region0: #{tpu_custom_call.1}
  #allocation0 [shape = 'u32[]', space=smem, size = 0x4, offset = 0x4, fixed_abs, tag = 'smem constant byte address 0x4 - core index']
  #allocation1 [shape = 'u32[72,128]{1,0:T(1,128)}', space=vmem, size = 0x9000, scoped, tag = 'internal scratch']
  %s0 = inlined_call_operand.vmem [shape: f32[2,8], index: 0, kind: input, shape index: {}]
  %s1 = inlined_call_operand.vmem [shape: f32[8,64], index: 1, kind: input, shape index: {}]
  %s2 = inlined_call_operand.vmem [shape: f32[1,64], index: 2, kind: input, shape index: {}]
  %s3 = inlined_call_operand.vmem [shape: f32[64,5], index: 3, kind: input, shape index: {}]
  %s4 = inlined_call_operand.vmem [shape: f32[1,5], index: 4, kind: input, shape index: {}]
  %s5 = inlined_call_operand.hbm [shape: f32[2,5], index: 5, kind: output, shape index: {}]
  %s6 = sld [smem:[#allocation0]]
  $region30: #{tpu_custom_call.1} parent=0
    _
  %s8 = ssub.s32 1, %s6
  %s9 = scalar_select 0, %s8, %s6
  $region1: #{tpu_custom_call.1} parent=0
    #allocation2 [shape = 'u8[1024]{0}', space=vmem, size = 0x400, scoped, tag = 'output window, operand 0, single buffered']
    #allocation3 [shape = 's32[1]{0}', space=sflag, size = 0x4, scoped, tag = 'scoped memory for tpu_custom_call.1']
    %10 = vsyncpa [#allocation3], 0
    // Predicated region
    $region2: #{tpu_custom_call.1} parent=1 // pred_check
      _
    $region3: #{tpu_custom_call.1} parent=1 // pred_check_branch
      %12 = sbr.rel (0) target = $region5
    $region4: #{tpu_custom_call.1} parent=1 // pred_region
      _
    $region5: #{tpu_custom_call.1} parent=1 // pred_fallthru
      _
    // Predicated region
    $region6: #{tpu_custom_call.1} parent=1 // pred_check
      _
    $region7: #{tpu_custom_call.1} parent=1 // pred_check_branch
      %14 = sbr.rel (0) target = $region9
    $region8: #{tpu_custom_call.1} parent=1 // pred_region
      _
    $region9: #{tpu_custom_call.1} parent=1 // pred_fallthru
      _
    // Predicated region
    $region10: #{tpu_custom_call.1} parent=1 // pred_check
      _
    $region11: #{tpu_custom_call.1} parent=1 // pred_check_branch
      %16 = sbr.rel (0) target = $region13
    $region12: #{tpu_custom_call.1} parent=1 // pred_region
      _
    $region13: #{tpu_custom_call.1} parent=1 // pred_fallthru
      _
    // Predicated region
    $region14: #{tpu_custom_call.1} parent=1 // pred_check
      _
    $region15: #{tpu_custom_call.1} parent=1 // pred_check_branch
      %18 = sbr.rel (0) target = $region17
    $region16: #{tpu_custom_call.1} parent=1 // pred_region
      _
    $region17: #{tpu_custom_call.1} parent=1 // pred_fallthru
      _
    // Predicated region
    $region18: #{tpu_custom_call.1} parent=1 // pred_check
      _
    $region19: #{tpu_custom_call.1} parent=1 // pred_check_branch
      %20 = sbr.rel (0) target = $region21
    $region20: #{tpu_custom_call.1} parent=1 // pred_region
      _
    $region21: #{tpu_custom_call.1} parent=1 // pred_fallthru
      _
    %v21 = vld [vmem:[%s0] sm:$0x3]
    %v22 = vld [vmem:[%s1] sm:$0xff]
    %v23 = vld [vmem:[%s2] sm:$0x1]
    %v25 = vperm.slane %v23, 0
    %vm27 = vcmask 64512
    %v29 = vsel %vm27, %v21, 0
    %31 = vmatpush.msra.mxu0 0.0
    %32 = vmatpush.msra.mxu0 0.0
    %33 = vmatpush.msra.mxu0 0.0
    %34 = vmatpush.msra.mxu0 0.0
    %35 = vmatpush.msra.mxu0 0.0
    %36 = vmatpush.msra.mxu0 0.0
    %37 = vmatpush.msra.mxu0 0.0
    %38 = vmatpush.msra.mxu0 0.0
    %39 = vmatpush.msra.mxu0 0.0
    %40 = vmatpush.msra.mxu0 0.0
    %41 = vmatpush.msra.mxu0 0.0
    %42 = vmatpush.msra.mxu0 0.0
    %43 = vmatpush.msra.mxu0 0.0
    %44 = vmatpush.msra.mxu0 0.0
    %45 = vmatpush.msra.mxu0 0.0
    %46 = vmatpush.msra.mxu0 %v22
    %47 = vmatmul.f32.gmra.mxu0 %v29
    %v48 = vpop.f32.mrf.mxu0
    %v49 = vadd.f32 %v25, %v48
    %50 = vdwg.mxu0
    %v51 = vmax.f32 %v49, 0.0
    %v52 = vld [vmem:[%s3] sm:$0xff]
    %v53 = vld [vmem:[%s3 + $0x8] sm:$0xff]
    %v54 = vld [vmem:[%s3 + $0x10] sm:$0xff]
    %v55 = vld [vmem:[%s3 + $0x18] sm:$0xff]
    %v56 = vld [vmem:[%s3 + $0x20] sm:$0xff]
    %v57 = vld [vmem:[%s3 + $0x28] sm:$0xff]
    %v58 = vld [vmem:[%s3 + $0x30] sm:$0xff]
    %v59 = vld [vmem:[%s3 + $0x38] sm:$0xff]
    %v60 = vld [vmem:[%s4] sm:$0x1]
    %v62 = vperm.slane %v60, 0
    %vm64 = vcmask 523264
    %v66 = vsel %vm64, %v51, 0
    %68 = vmatpush.msra.mxu0 0.0
    %69 = vmatpush.msra.mxu0 0.0
    %70 = vmatpush.msra.mxu0 0.0
    %71 = vmatpush.msra.mxu0 0.0
    %72 = vmatpush.msra.mxu0 0.0
    %73 = vmatpush.msra.mxu0 0.0
    %74 = vmatpush.msra.mxu0 0.0
    %75 = vmatpush.msra.mxu0 0.0
    %76 = vmatpush.msra.mxu0 %v59
    %77 = vmatpush.msra.mxu0 %v58
    %78 = vmatpush.msra.mxu0 %v57
    %79 = vmatpush.msra.mxu0 %v56
    %80 = vmatpush.msra.mxu0 %v55
    %81 = vmatpush.msra.mxu0 %v54
    %82 = vmatpush.msra.mxu0 %v53
    %83 = vmatpush.msra.mxu0 %v52
    %84 = vmatmul.f32.gmra.mxu0 %v66
    %v85 = vpop.f32.mrf.mxu0
    %v86 = vadd.f32 %v62, %v85
    %87 = vdwg.mxu0
    %vm88 = vcmask 25600
    %v89 = vsel %vm88, %v86, -inf
    %90 = vmax.xlane.f32.xlu0 %v89
    %v91 = vpop.xlane.xlu0 %90
    %v92 = vsub.f32 %v86, %v91
    %v93 = vmul.f32 %v92, 1.442695
    %v94 = vpow.pop %v93
    %v95 = vsel %vm88, %v94, 0.0
    %96 = vadd.xlane.f32.xlu0 %v95
    %v97 = vpop.xlane.xlu0 %96
    %v98 = vrcp.pop %v97
    %v99 = vmul.f32 %v97, %v98
    %v100 = vsub.f32 1.0, %v99
    %v101 = vmul.f32 %v98, %v100
    %v102 = vadd.f32 %v98, %v101
    %vm103 = vweird.f32 %v97
    %vm104 = vweird.f32 %v98
    %vm105 = vmor %vm103, %vm104
    %v106 = vsel %vm105, %v98, %v102
    %v107 = vand.u32 2147483647, %v97
    %vm108 = vcmp.eq.f32.partialorder %v107, 8.507059e+37
    %v109 = vand.u32 %v97, 2147483648
    %v110 = vor.u32 1.1754944e-38, %v109
    %v111 = vsel %vm108, %v110, %v106
    %v112 = vmul.f32 %v94, %v111
    %vm113 = vcmask 31744
    %v114 = vsel %vm113, %v112, %v86
    %vm115 = vcmask 33792
    %116 = vst.msk [vmem:[#allocation2] sm:$0x3] %vm115, %v114
    // Predicated region
    $region22: #{tpu_custom_call.1} parent=1 // pred_check
      _
    $region23: #{tpu_custom_call.1} parent=1 // pred_check_branch
      %118 = sbr.rel (0) target = $region25
    $region24: #{tpu_custom_call.1} parent=1 // pred_region
      %120 = vsyncadd [#allocation3], 0
      %s122 = sshll.u32 [#allocation2], 4
      %s123 = int_to_ptr.vmem [resolvable:$true] %s122
      %s124 = sshll.u32 %s5, 4
      %s125 = int_to_ptr.hbm [resolvable:$true] %s124
      %127 = dma.vmem_to_hbm [thread:$0]  %s123, 32, %s125, [#allocation3]
    $region25: #{tpu_custom_call.1} parent=1 // pred_fallthru
      _
    // Predicated region
    $region26: #{tpu_custom_call.1} parent=1 // pred_check
      _
    $region27: #{tpu_custom_call.1} parent=1 // pred_check_branch
      %129 = sbr.rel (0) target = $region29
    $region28: #{tpu_custom_call.1} parent=1 // pred_region
      %131 = dma.done [#allocation3], 32
    $region29: #{tpu_custom_call.1} parent=1 // pred_fallthru
      _
    %132 = vsyncpa [#allocation3], 1

</llo_original>
